<compile_context>
chip_gen: v7x
topology: tpu7x:2x2x1
jax: 0.10.0
libtpu: 0.0.40
codegen_flags: <defaults>
</compile_context>

<pallas_src>
import functools

import jax
import jax.numpy as jnp
from jax import lax
from jax.experimental import pallas as pl
from jax.experimental.pallas import tpu as pltpu


def _round_up(v, m):
    return ((v + m - 1) // m) * m


# Giles (2012) single-precision erfinv(x) polynomial coefficients.
_ERFINV_CENTRAL = (2.81022636e-08, 3.43273939e-07, -3.5233877e-06,
                   -4.39150654e-06, 2.1858087e-04, -1.25372503e-03,
                   -4.17768164e-03, 2.46640727e-01, 1.50140941e+00)
_ERFINV_TAIL = (-2.00214257e-04, 1.00950558e-04, 1.34934322e-03,
                -3.67342844e-03, 5.73950773e-03, -7.6224613e-03,
                9.43887047e-03, 1.00167406e+00, 2.83297682e+00)


def _gaussian_noise_kernel(seed_ref, x_ref, o_ref, *, rows_per_tile, lanes,
                           mean, std):
    """One lane-dense tile: out = x + (std * N(0,1) + mean)."""
    shape = x_ref.shape  # (rows_per_tile, lanes)
    row = lax.broadcasted_iota(jnp.int32, shape, 0)
    lane = lax.broadcasted_iota(jnp.int32, shape, 1)
    base_row = pl.program_id(0) * rows_per_tile
    # Unique global element id (wraps for >2^31 elements; fine for noise).
    idx = (base_row + row) * lanes + lane

    # --- counter-based PRNG: murmur3 fmix32 of (idx + seed * golden-ratio) ---
    # The seed carries full 32-bit entropy per call; the odd multiplier keeps
    # per-call streams from being trivially shifted copies of each other.
    h = (idx + seed_ref[0] * jnp.int32(-1640531527)).astype(jnp.uint32)  # 0x9E3779B9
    h = (h ^ (h >> 16)) * jnp.uint32(0x85EBCA6B)
    h = (h ^ (h >> 13)) * jnp.uint32(0xC2B2AE35)
    h = h ^ (h >> 16)

    # Exponent trick: top 23 bits -> f32 in [1, 2); map to symmetric x in
    # (-1, 1) that never reaches +-1 (so log(1 - x^2) is always finite).
    fbits = ((h >> 9) & jnp.uint32(0x007FFFFF)) | jnp.uint32(0x3F800000)
    u12 = lax.bitcast_convert_type(fbits, jnp.float32)          # [1, 2)
    xr = 2.0 * (u12 - 1.0) - jnp.float32(1.0 - 2.0 ** -23)      # (-1, 1)

    # z = sqrt(2) * erfinv(xr) ~ N(0, 1).  std*sqrt(2) is folded into the
    # polynomial coefficients at trace time -> zero extra runtime ops.
    s = float(std) * (2.0 ** 0.5)
    w = -jnp.log(1.0 - xr * xr)
    # central branch (w < 5), covers |z| up to ~2.9
    wc = w - 2.5
    p = jnp.float32(_ERFINV_CENTRAL[0] * s)
    for c in _ERFINV_CENTRAL[1:]:
        p = p * wc + jnp.float32(c * s)
    # tail branch (w >= 5), covers |z| up to ~5.3 (23-bit uniform limit)
    wt = jnp.sqrt(w) - 3.0
    q = jnp.float32(_ERFINV_TAIL[0] * s)
    for c in _ERFINV_TAIL[1:]:
        q = q * wt + jnp.float32(c * s)

    noise = jnp.where(w < 5.0, p, q) * xr + jnp.float32(mean)
    o_ref[...] = (x_ref[...].astype(jnp.float32) + noise).astype(o_ref.dtype)


@functools.partial(jax.jit, static_argnames=("mean", "std"))
def gaussian_noise_forward(x, key, mean=0.0, std=0.1):
    orig_shape = x.shape
    n = x.size

    # Lane-dense 2-D layout.  Prefer the widest lane count that divides n so
    # no flat padding (and no output slice copy) is needed for typical shapes.
    if n % 512 == 0 and n // 512 >= 8:
        lanes = 512
    elif n % 256 == 0 and n // 256 >= 8:
        lanes = 256
    else:
        lanes = 128
    rows_total = pl.cdiv(n, lanes)
    padded = rows_total * lanes

    xf = jnp.ravel(x)
    if padded != n:                      # only when n is not a multiple of 128
        xf = jnp.pad(xf, (0, padded - n))
    x2 = xf.reshape(rows_total, lanes)

    # Row tiling: blocks <= 1024 rows (<= 2 MiB f32 at 512 lanes, so
    # in+out double-buffered stays well under v5e's 16 MiB scoped VMEM), and
    # >= 4 grid steps when possible so the parallel axis can be split across
    # v7x's two TensorCores.  A ragged last block is handled by Pallas.
    if rows_total <= 8:
        rows_per_tile = rows_total       # full-dim block (allowed even if < 8)
    else:
        rows_per_tile = max(8, min(1024, _round_up(pl.cdiv(rows_total, 4), 8)))
    n_tiles = pl.cdiv(rows_total, rows_per_tile)

    # Full-entropy 32-bit seed word per call (lives in SMEM).
    seed = jax.random.randint(key, (1,), jnp.iinfo(jnp.int32).min,
                              jnp.iinfo(jnp.int32).max, dtype=jnp.int32)

    out2 = pl.pallas_call(
        functools.partial(_gaussian_noise_kernel,
                          rows_per_tile=rows_per_tile, lanes=lanes,
                          mean=float(mean), std=float(std)),
        out_shape=jax.ShapeDtypeStruct((rows_total, lanes), x.dtype),
        grid=(n_tiles,),
        in_specs=[
            pl.BlockSpec(memory_space=pltpu.MemorySpace.SMEM),        # seed (1,)
            pl.BlockSpec((rows_per_tile, lanes), lambda i: (i, 0)),   # x tile
        ],
        out_specs=pl.BlockSpec((rows_per_tile, lanes), lambda i: (i, 0)),
        compiler_params=pltpu.CompilerParams(
            dimension_semantics=("parallel",)),
    )(seed, x2)

    if padded != n:
        return jnp.ravel(out2)[:n].reshape(orig_shape)
    return out2.reshape(orig_shape)


if __name__ == "__main__":
    key = jax.random.PRNGKey(0)
    k_data, k_noise = jax.random.split(key)

    # Small NCHW batch of "images" in [0, 1], like the module would see.
    x = jax.random.uniform(k_data, (2, 4, 16, 16), dtype=jnp.float32)

    y = gaussian_noise_forward(x, k_noise, mean=0.0, std=0.1)
    jax.block_until_ready(y)

    assert y.shape == x.shape and y.dtype == x.dtype
    assert bool(jnp.all(jnp.isfinite(y)))

    # Sanity: the added noise statistically matches N(0, 0.1).
    noise = y - x
    n_mean = float(jnp.mean(noise))
    n_std = float(jnp.std(noise))
    assert abs(n_mean) < 0.03, f"noise mean off: {n_mean}"
    assert abs(n_std - 0.1) < 0.03, f"noise std off: {n_std}"

    print("KERNEL_OK")
</pallas_src>

<mosaic_0001>
module attributes {stable_mosaic.version = 11 : i64} {
  func.func @_gaussian_noise_kernel(%arg0: i32, %arg1: memref<1xi32, #tpu.memory_space<smem>>, %arg2: memref<8x256xf32, #tpu.memory_space<vmem>>, %arg3: memref<8x256xf32, #tpu.memory_space<vmem>>) attributes {dimension_semantics = [#tpu.dimension_semantics<parallel>], iteration_bounds = array<i64: 1>, scalar_prefetch = 0 : i64, scratch_operands = 0 : i64, tpu.core_type = #tpu.core_type<tc>, window_params = [{transform_indices = @transform_0, window_bounds = array<i64: 1>}, {transform_indices = @transform_1, window_bounds = array<i64: 8, 256>}, {transform_indices = @transform_2, window_bounds = array<i64: 8, 256>}]} {
    %0 = tpu.iota {dimensions = array<i32: 0>} : vector<8x256xi32>
    %1 = tpu.iota {dimensions = array<i32: 1>} : vector<8x256xi32>
    %c8_i32 = arith.constant 8 : i32
    %2 = arith.muli %arg0, %c8_i32 : i32
    %3 = vector.broadcast %2 : i32 to vector<8x256xi32>
    %4 = arith.addi %3, %0 : vector<8x256xi32>
    %c256_i32 = arith.constant 256 : i32
    %5 = vector.broadcast %c256_i32 : i32 to vector<8x256xi32>
    %6 = arith.muli %4, %5 : vector<8x256xi32>
    %7 = arith.addi %6, %1 : vector<8x256xi32>
    %c0 = arith.constant 0 : index
    %8 = memref.load %arg1[%c0] : memref<1xi32, #tpu.memory_space<smem>>
    %c-1640531527_i32 = arith.constant -1640531527 : i32
    %9 = arith.muli %8, %c-1640531527_i32 : i32
    %10 = vector.broadcast %9 : i32 to vector<8x256xi32>
    %11 = arith.addi %7, %10 : vector<8x256xi32>
    %c16_i32 = arith.constant 16 : i32
    %12 = vector.broadcast %c16_i32 : i32 to vector<8x256xi32>
    %13 = arith.shrui %11, %12 : vector<8x256xi32>
    %14 = arith.xori %11, %13 : vector<8x256xi32>
    %c-2048144789_i32 = arith.constant -2048144789 : i32
    %15 = vector.broadcast %c-2048144789_i32 : i32 to vector<8x256xi32>
    %16 = arith.muli %14, %15 : vector<8x256xi32>
    %c13_i32 = arith.constant 13 : i32
    %17 = vector.broadcast %c13_i32 : i32 to vector<8x256xi32>
    %18 = arith.shrui %16, %17 : vector<8x256xi32>
    %19 = arith.xori %16, %18 : vector<8x256xi32>
    %c-1028477387_i32 = arith.constant -1028477387 : i32
    %20 = vector.broadcast %c-1028477387_i32 : i32 to vector<8x256xi32>
    %21 = arith.muli %19, %20 : vector<8x256xi32>
    %c16_i32_0 = arith.constant 16 : i32
    %22 = vector.broadcast %c16_i32_0 : i32 to vector<8x256xi32>
    %23 = arith.shrui %21, %22 : vector<8x256xi32>
    %24 = arith.xori %21, %23 : vector<8x256xi32>
    %c9_i32 = arith.constant 9 : i32
    %25 = vector.broadcast %c9_i32 : i32 to vector<8x256xi32>
    %26 = arith.shrui %24, %25 : vector<8x256xi32>
    %c8388607_i32 = arith.constant 8388607 : i32
    %27 = vector.broadcast %c8388607_i32 : i32 to vector<8x256xi32>
    %28 = arith.andi %26, %27 : vector<8x256xi32>
    %c1065353216_i32 = arith.constant 1065353216 : i32
    %29 = vector.broadcast %c1065353216_i32 : i32 to vector<8x256xi32>
    %30 = arith.ori %28, %29 : vector<8x256xi32>
    %31 = tpu.bitcast %30 : vector<8x256xi32> -> vector<8x256xf32>
    %cst = arith.constant 1.000000e+00 : f32
    %32 = vector.broadcast %cst : f32 to vector<8x256xf32>
    %33 = arith.subf %31, %32 : vector<8x256xf32>
    %cst_1 = arith.constant 2.000000e+00 : f32
    %34 = vector.broadcast %cst_1 : f32 to vector<8x256xf32>
    %35 = arith.mulf %34, %33 : vector<8x256xf32>
    %cst_2 = arith.constant 0.99999988 : f32
    %36 = vector.broadcast %cst_2 : f32 to vector<8x256xf32>
    %37 = arith.subf %35, %36 : vector<8x256xf32>
    %38 = arith.mulf %37, %37 : vector<8x256xf32>
    %cst_3 = arith.constant 1.000000e+00 : f32
    %39 = vector.broadcast %cst_3 : f32 to vector<8x256xf32>
    %40 = arith.subf %39, %38 : vector<8x256xf32>
    %41 = math.log %40 : vector<8x256xf32>
    %cst_4 = arith.constant 0.000000e+00 : f32
    %42 = vector.broadcast %cst_4 : f32 to vector<8x256xf32>
    %43 = arith.subf %42, %41 : vector<8x256xf32>
    %cst_5 = arith.constant 2.500000e+00 : f32
    %44 = vector.broadcast %cst_5 : f32 to vector<8x256xf32>
    %45 = arith.subf %43, %44 : vector<8x256xf32>
    %cst_6 = arith.constant 3.974260e-09 : f32
    %46 = vector.broadcast %cst_6 : f32 to vector<8x256xf32>
    %47 = arith.mulf %46, %45 : vector<8x256xf32>
    %cst_7 = arith.constant 4.85462657E-8 : f32
    %48 = vector.broadcast %cst_7 : f32 to vector<8x256xf32>
    %49 = arith.addf %47, %48 : vector<8x256xf32>
    %50 = arith.mulf %49, %45 : vector<8x256xf32>
    %cst_8 = arith.constant -4.98282247E-7 : f32
    %51 = vector.broadcast %cst_8 : f32 to vector<8x256xf32>
    %52 = arith.addf %50, %51 : vector<8x256xf32>
    %53 = arith.mulf %52, %45 : vector<8x256xf32>
    %cst_9 = arith.constant -6.21052834E-7 : f32
    %54 = vector.broadcast %cst_9 : f32 to vector<8x256xf32>
    %55 = arith.addf %53, %54 : vector<8x256xf32>
    %56 = arith.mulf %55, %45 : vector<8x256xf32>
    %cst_10 = arith.constant 3.09120041E-5 : f32
    %57 = vector.broadcast %cst_10 : f32 to vector<8x256xf32>
    %58 = arith.addf %56, %57 : vector<8x256xf32>
    %59 = arith.mulf %58, %45 : vector<8x256xf32>
    %cst_11 = arith.constant -1.77303489E-4 : f32
    %60 = vector.broadcast %cst_11 : f32 to vector<8x256xf32>
    %61 = arith.addf %59, %60 : vector<8x256xf32>
    %62 = arith.mulf %61, %45 : vector<8x256xf32>
    %cst_12 = arith.constant -5.90813404E-4 : f32
    %63 = vector.broadcast %cst_12 : f32 to vector<8x256xf32>
    %64 = arith.addf %62, %63 : vector<8x256xf32>
    %65 = arith.mulf %64, %45 : vector<8x256xf32>
    %cst_13 = arith.constant 0.0348802656 : f32
    %66 = vector.broadcast %cst_13 : f32 to vector<8x256xf32>
    %67 = arith.addf %65, %66 : vector<8x256xf32>
    %68 = arith.mulf %67, %45 : vector<8x256xf32>
    %cst_14 = arith.constant 0.212331355 : f32
    %69 = vector.broadcast %cst_14 : f32 to vector<8x256xf32>
    %70 = arith.addf %68, %69 : vector<8x256xf32>
    %71 = math.sqrt %43 : vector<8x256xf32>
    %cst_15 = arith.constant 3.000000e+00 : f32
    %72 = vector.broadcast %cst_15 : f32 to vector<8x256xf32>
    %73 = arith.subf %71, %72 : vector<8x256xf32>
    %cst_16 = arith.constant -2.8314571E-5 : f32
    %74 = vector.broadcast %cst_16 : f32 to vector<8x256xf32>
    %75 = arith.mulf %74, %73 : vector<8x256xf32>
    %cst_17 = arith.constant 1.42765648E-5 : f32
    %76 = vector.broadcast %cst_17 : f32 to vector<8x256xf32>
    %77 = arith.addf %75, %76 : vector<8x256xf32>
    %78 = arith.mulf %77, %73 : vector<8x256xf32>
    %cst_18 = arith.constant 1.90825944E-4 : f32
    %79 = vector.broadcast %cst_18 : f32 to vector<8x256xf32>
    %80 = arith.addf %78, %79 : vector<8x256xf32>
    %81 = arith.mulf %80, %73 : vector<8x256xf32>
    %cst_19 = arith.constant -5.1950122E-4 : f32
    %82 = vector.broadcast %cst_19 : f32 to vector<8x256xf32>
    %83 = arith.addf %81, %82 : vector<8x256xf32>
    %84 = arith.mulf %83, %73 : vector<8x256xf32>
    %cst_20 = arith.constant 8.11688951E-4 : f32
    %85 = vector.broadcast %cst_20 : f32 to vector<8x256xf32>
    %86 = arith.addf %84, %85 : vector<8x256xf32>
    %87 = arith.mulf %86, %73 : vector<8x256xf32>
    %cst_21 = arith.constant -0.00107797887 : f32
    %88 = vector.broadcast %cst_21 : f32 to vector<8x256xf32>
    %89 = arith.addf %87, %88 : vector<8x256xf32>
    %90 = arith.mulf %89, %73 : vector<8x256xf32>
    %cst_22 = arith.constant 0.00133485789 : f32
    %91 = vector.broadcast %cst_22 : f32 to vector<8x256xf32>
    %92 = arith.addf %90, %91 : vector<8x256xf32>
    %93 = arith.mulf %92, %73 : vector<8x256xf32>
    %cst_23 = arith.constant 0.141658098 : f32
    %94 = vector.broadcast %cst_23 : f32 to vector<8x256xf32>
    %95 = arith.addf %93, %94 : vector<8x256xf32>
    %96 = arith.mulf %95, %73 : vector<8x256xf32>
    %cst_24 = arith.constant 0.400643438 : f32
    %97 = vector.broadcast %cst_24 : f32 to vector<8x256xf32>
    %98 = arith.addf %96, %97 : vector<8x256xf32>
    %cst_25 = arith.constant 5.000000e+00 : f32
    %99 = vector.broadcast %cst_25 : f32 to vector<8x256xf32>
    %100 = arith.cmpf olt, %43, %99 : vector<8x256xf32>
    %101 = arith.select %100, %70, %98 : vector<8x256xi1>, vector<8x256xf32>
    %102 = arith.mulf %101, %37 : vector<8x256xf32>
    %cst_26 = arith.constant 0.000000e+00 : f32
    %103 = vector.broadcast %cst_26 : f32 to vector<8x256xf32>
    %104 = arith.addf %102, %103 : vector<8x256xf32>
    %c0_27 = arith.constant 0 : index
    %c0_28 = arith.constant 0 : index
    %105 = vector.load %arg2[%c0_27, %c0_28] : memref<8x256xf32, #tpu.memory_space<vmem>>, vector<8x256xf32>
    %106 = arith.addf %105, %104 : vector<8x256xf32>
    %c0_29 = arith.constant 0 : index
    %c0_30 = arith.constant 0 : index
    %107 = vector.load %arg3[%c0_29, %c0_30] : memref<8x256xf32, #tpu.memory_space<vmem>>, vector<8x256xf32>
    tpu.vector_store %arg3[%c0_29, %c0_30], %106 {strides = array<i32>} : memref<8x256xf32, #tpu.memory_space<vmem>>, vector<8x256xf32>,
    return
  }
  func.func @transform_0(%arg0: i32) -> i32 {
    %c0_i32 = arith.constant 0 : i32
    %c0_i32_0 = arith.constant 0 : i32
    return %c0_i32 : i32
  }
  func.func @transform_1(%arg0: i32) -> (i32, i32) {
    %c0_i32 = arith.constant 0 : i32
    %c0_i32_0 = arith.constant 0 : i32
    return %arg0, %c0_i32 : i32, i32
  }
  func.func @transform_2(%arg0: i32) -> (i32, i32) {
    %c0_i32 = arith.constant 0 : i32
    %c0_i32_0 = arith.constant 0 : i32
    return %arg0, %c0_i32 : i32, i32
  }
}

</mosaic_0001>

<llo_original>
// kernel: gaussian_noise_forward.1
$region0: #{gaussian_noise_forward.1}
  #allocation0 [shape = 'u32[]', space=smem, size = 0x4, offset = 0x4, fixed_abs, tag = 'smem constant byte address 0x4 - core index']
  #allocation1 [shape = 'u32[144,128]{1,0:T(1,128)}', space=vmem, size = 0x12000, scoped, tag = 'internal scratch']
  #allocation2 [shape = 's32[1]{0:T(128)S(6)}', space=smem, size = 0x200, scoped, tag = 'scoped memory for gaussian_noise_forward.1']
  %s0 = inlined_call_operand.<no memory space> [shape: s32[1], index: 0, kind: input, shape index: {}]
  %s1 = inlined_call_operand.vmem [shape: f32[8,256], index: 1, kind: input, shape index: {}]
  %s2 = inlined_call_operand.vmem [shape: f32[8,256], index: 2, kind: output, shape index: {}]
  %s3 = sld [smem:[#allocation0]]
  $region18: #{gaussian_noise_forward.1} parent=0
    _
  %s5 = ssub.s32 1, %s3
  %s6 = scalar_select 0, %s5, %s3
  %7 = sst [smem:[#allocation2]] %s0
  // Predicated region
  $region2: #{gaussian_noise_forward.1} parent=0 // pred_check
    _
  $region3: #{gaussian_noise_forward.1} parent=0 // pred_check_branch
    %9 = sbr.rel (0) target = $region5
  $region4: #{gaussian_noise_forward.1} parent=0 // pred_region
    _
  $region5: #{gaussian_noise_forward.1} parent=0 // pred_fallthru
    _
  // Predicated region
  $region6: #{gaussian_noise_forward.1} parent=0 // pred_check
    _
  $region7: #{gaussian_noise_forward.1} parent=0 // pred_check_branch
    %11 = sbr.rel (0) target = $region9
  $region8: #{gaussian_noise_forward.1} parent=0 // pred_region
    _
  $region9: #{gaussian_noise_forward.1} parent=0 // pred_fallthru
    _
  %v12 = vlaneseq
  %v13 = vshrl.u32 %v12, 7
  %v14 = vlaneseq
  %v15 = vand.u32 %v14, 127
  %v16 = vadd.s32 %v15, 128
  %s17 = smul.u32 0, 8
  %v18 = vstv %s17
  %v19 = vadd.s32 %v18, %v13
  %v20 = vmul.u32 %v19, 256
  %v21 = vadd.s32 %v20, %v15
  %v22 = vadd.s32 %v20, %v16
  %s23 = sld [smem:[#allocation2]]
  %s24 = smul.u32 %s23, 2654435769
  %v25 = vstv %s24
  %v26 = vadd.s32 %v21, %v25
  %v27 = vadd.s32 %v22, %v25
  %v28 = vshrl.u32 %v26, 16
  %v29 = vshrl.u32 %v27, 16
  %v30 = vxor.u32 %v26, %v28
  %v31 = vxor.u32 %v27, %v29
  %v32 = vmul.u32 %v30, 2246822507
  %v33 = vmul.u32 %v31, 2246822507
  %v34 = vshrl.u32 %v32, 13
  %v35 = vshrl.u32 %v33, 13
  %v36 = vxor.u32 %v32, %v34
  %v37 = vxor.u32 %v33, %v35
  %v38 = vmul.u32 %v36, 3266489909
  %v39 = vmul.u32 %v37, 3266489909
  %v40 = vshrl.u32 %v38, 16
  %v41 = vshrl.u32 %v39, 16
  %v42 = vxor.u32 %v38, %v40
  %v43 = vxor.u32 %v39, %v41
  %v44 = vshrl.u32 %v42, 9
  %v45 = vshrl.u32 %v43, 9
  %v46 = vand.u32 %v44, 8388607
  %v47 = vand.u32 %v45, 8388607
  %v48 = vor.u32 %v46, 1065353216
  %v49 = vor.u32 %v47, 1065353216
  %v52 = vsub.f32 %v48, 1.0
  %v53 = vsub.f32 %v49, 1.0
  %v54 = vmul.f32 %v52, 2.0
  %v55 = vmul.f32 %v53, 2.0
  %v56 = vsub.f32 %v54, 0.9999999
  %v57 = vsub.f32 %v55, 0.9999999
  %v58 = vmul.f32 %v56, %v56
  %v59 = vmul.f32 %v57, %v57
  %v60 = vsub.f32 1.0, %v58
  %v61 = vsub.f32 1.0, %v59
  %v62 = vlog2.pop %v60
  %v63 = vmul.f32 %v62, 0.6931472
  %v64 = vlog2.pop %v61
  %v65 = vmul.f32 %v64, 0.6931472
  %v66 = vsub.f32 0.0, %v63
  %v67 = vsub.f32 0.0, %v65
  %v68 = vsub.f32 %v66, 2.5
  %v69 = vsub.f32 %v67, 2.5
  %v70 = vmul.f32 %v68, 3.97426e-09
  %v71 = vmul.f32 %v69, 3.97426e-09
  %v72 = vadd.f32 %v70, 4.8546266e-08
  %v73 = vadd.f32 %v71, 4.8546266e-08
  %v74 = vmul.f32 %v72, %v68
  %v75 = vmul.f32 %v73, %v69
  %v76 = vadd.f32 %v74, -4.9828225e-07
  %v77 = vadd.f32 %v75, -4.9828225e-07
  %v78 = vmul.f32 %v76, %v68
  %v79 = vmul.f32 %v77, %v69
  %v80 = vadd.f32 %v78, -6.2105283e-07
  %v81 = vadd.f32 %v79, -6.2105283e-07
  %v82 = vmul.f32 %v80, %v68
  %v83 = vmul.f32 %v81, %v69
  %v84 = vadd.f32 %v82, 3.0912004e-05
  %v85 = vadd.f32 %v83, 3.0912004e-05
  %v86 = vmul.f32 %v84, %v68
  %v87 = vmul.f32 %v85, %v69
  %v88 = vadd.f32 %v86, -0.00017730349
  %v89 = vadd.f32 %v87, -0.00017730349
  %v90 = vmul.f32 %v88, %v68
  %v91 = vmul.f32 %v89, %v69
  %v92 = vadd.f32 %v90, -0.0005908134
  %v93 = vadd.f32 %v91, -0.0005908134
  %v94 = vmul.f32 %v92, %v68
  %v95 = vmul.f32 %v93, %v69
  %v96 = vadd.f32 %v94, 0.034880266
  %v97 = vadd.f32 %v95, 0.034880266
  %v98 = vmul.f32 %v96, %v68
  %v99 = vmul.f32 %v97, %v69
  %v100 = vadd.f32 %v98, 0.21233135
  %v101 = vadd.f32 %v99, 0.21233135
  %v102 = vrsqrt.pop %v66
  %v103 = vmul.f32 %v66, %v102
  %vm104 = vcmp.eq.f32.partialorder %v66, inf
  %v105 = vsel %vm104, %v66, %v103
  %vm106 = vcmp.eq.f32.partialorder %v66, 0.0
  %v107 = vand.u32 %v66, 2147483648
  %v108 = vsel %vm106, %v107, %v105
  %v109 = vrsqrt.pop %v67
  %v110 = vmul.f32 %v67, %v109
  %vm111 = vcmp.eq.f32.partialorder %v67, inf
  %v112 = vsel %vm111, %v67, %v110
  %vm113 = vcmp.eq.f32.partialorder %v67, 0.0
  %v114 = vand.u32 %v67, 2147483648
  %v115 = vsel %vm113, %v114, %v112
  %v116 = vsub.f32 %v108, 3.0
  %v117 = vsub.f32 %v115, 3.0
  %v118 = vmul.f32 %v116, -2.8314571e-05
  %v119 = vmul.f32 %v117, -2.8314571e-05
  %v120 = vadd.f32 %v118, 1.4276565e-05
  %v121 = vadd.f32 %v119, 1.4276565e-05
  %v122 = vmul.f32 %v120, %v116
  %v123 = vmul.f32 %v121, %v117
  %v124 = vadd.f32 %v122, 0.00019082594
  %v125 = vadd.f32 %v123, 0.00019082594
  %v126 = vmul.f32 %v124, %v116
  %v127 = vmul.f32 %v125, %v117
  %v128 = vadd.f32 %v126, -0.0005195012
  %v129 = vadd.f32 %v127, -0.0005195012
  %v130 = vmul.f32 %v128, %v116
  %v131 = vmul.f32 %v129, %v117
  %v132 = vadd.f32 %v130, 0.00081168895
  %v133 = vadd.f32 %v131, 0.00081168895
  %v134 = vmul.f32 %v132, %v116
  %v135 = vmul.f32 %v133, %v117
  %v136 = vadd.f32 %v134, -0.0010779789
  %v137 = vadd.f32 %v135, -0.0010779789
  %v138 = vmul.f32 %v136, %v116
  %v139 = vmul.f32 %v137, %v117
  %v140 = vadd.f32 %v138, 0.0013348579
  %v141 = vadd.f32 %v139, 0.0013348579
  %v142 = vmul.f32 %v140, %v116
  %v143 = vmul.f32 %v141, %v117
  %v144 = vadd.f32 %v142, 0.1416581
  %v145 = vadd.f32 %v143, 0.1416581
  %v146 = vmul.f32 %v144, %v116
  %v147 = vmul.f32 %v145, %v117
  %v148 = vadd.f32 %v146, 0.40064344
  %v149 = vadd.f32 %v147, 0.40064344
  %vm150 = vcmp.lt.f32.partialorder %v66, 5.0
  %vm151 = vcmp.lt.f32.partialorder %v67, 5.0
  %v152 = vsel %vm150, %v100, %v148
  %v153 = vsel %vm151, %v101, %v149
  %v154 = vmul.f32 %v152, %v56
  %v155 = vmul.f32 %v153, %v57
  %v156 = vadd.f32 %v154, 0.0
  %v157 = vadd.f32 %v155, 0.0
  %v158 = vld [vmem:[%s1] sm:$0xff]
  %v159 = vld [vmem:[%s1 + $0x8] sm:$0xff]
  %v160 = vadd.f32 %v158, %v156
  %v161 = vadd.f32 %v159, %v157
  %162 = vst [vmem:[%s2] sm:$0xff] %v160
  %163 = vst [vmem:[%s2 + $0x8] sm:$0xff] %v161
  // Predicated region
  $region10: #{gaussian_noise_forward.1} parent=0 // pred_check
    _
  $region11: #{gaussian_noise_forward.1} parent=0 // pred_check_branch
    %165 = sbr.rel (0) target = $region13
  $region12: #{gaussian_noise_forward.1} parent=0 // pred_region
    _
  $region13: #{gaussian_noise_forward.1} parent=0 // pred_fallthru
    _
  // Predicated region
  $region14: #{gaussian_noise_forward.1} parent=0 // pred_check
    _
  $region15: #{gaussian_noise_forward.1} parent=0 // pred_check_branch
    %167 = sbr.rel (0) target = $region17
  $region16: #{gaussian_noise_forward.1} parent=0 // pred_region
    _
  $region17: #{gaussian_noise_forward.1} parent=0 // pred_fallthru
    _

</llo_original>
